<compile_context>
chip_gen: v6e
topology: v6e:2x2x1
jax: 0.10.0
libtpu: 0.0.40
codegen_flags: <defaults>
</compile_context>

<pallas_src>
import jax
import jax.numpy as jnp
from jax.experimental import pallas as pl
from jax.experimental.pallas import tpu as pltpu


def _round_up(n, m):
    return ((n + m - 1) // m) * m


def _pick_tile(full, target, aligns):
    """Largest tile <= target that divides `full` and is a multiple of one of
    `aligns` (tried in order), falling back to the full dimension (a full-extent
    block is always a legal block size)."""
    if full <= target:
        return full
    for align in aligns:
        t = (min(target, full) // align) * align
        while t >= align:
            if full % t == 0:
                return t
            t -= align
    return full


def _detect_generation():
    try:
        kind = jax.devices()[0].device_kind.lower()
    except Exception:
        return "unknown"
    if "7" in kind:
        return "v7x"
    if "v6" in kind or "6e" in kind:
        return "v6e"
    if "v5" in kind or "5e" in kind or "5p" in kind:
        return "v5e"
    return "unknown"


def _vmem_capacity_bytes(gen):
    try:
        cap = getattr(pltpu.get_tpu_info(), "vmem_capacity_bytes", None)
        if cap:
            return int(cap)
    except Exception:
        pass
    return (64 << 20) if gen == "v7x" else (128 << 20)


# ---------------------------------------------------------------------------
# Kernels
# ---------------------------------------------------------------------------

def _ffn_kernel_f32_out(x_ref, w1_ref, b1_ref, w2_ref, b2_ref, o_ref):
    """f32 output: accumulate straight into the VMEM-resident output block
    (its index_map ignores k) -- no scratch, no final copy/cast."""
    k = pl.program_id(1)
    h = jnp.dot(x_ref[...], w1_ref[...], preferred_element_type=jnp.float32)
    h = jnp.maximum(h + b1_ref[...].astype(jnp.float32), 0.0)
    contrib = jnp.dot(h.astype(w2_ref.dtype), w2_ref[...],
                      preferred_element_type=jnp.float32)

    @pl.when(k == 0)
    def _():
        # b2 folded into the first k-step (no separate init write + re-read).
        o_ref[...] = contrib + jnp.broadcast_to(
            b2_ref[...].astype(jnp.float32), o_ref.shape)

    @pl.when(k > 0)
    def _():
        o_ref[...] += contrib


def _ffn_kernel_acc(x_ref, w1_ref, b1_ref, w2_ref, b2_ref, o_ref, acc_ref):
    """Non-f32 output (e.g. bf16): keep an f32 VMEM accumulator, cast once at
    the last k step."""
    k = pl.program_id(1)
    h = jnp.dot(x_ref[...], w1_ref[...], preferred_element_type=jnp.float32)
    h = jnp.maximum(h + b1_ref[...].astype(jnp.float32), 0.0)
    contrib = jnp.dot(h.astype(w2_ref.dtype), w2_ref[...],
                      preferred_element_type=jnp.float32)

    @pl.when(k == 0)
    def _():
        acc_ref[...] = contrib + jnp.broadcast_to(
            b2_ref[...].astype(jnp.float32), acc_ref.shape)

    @pl.when(k > 0)
    def _():
        acc_ref[...] += contrib

    @pl.when(k == pl.num_programs(1) - 1)
    def _():
        o_ref[...] = acc_ref[...].astype(o_ref.dtype)


# ---------------------------------------------------------------------------
# Wrapper
# ---------------------------------------------------------------------------

# Roofline-derived token-tile targets (rows) for bf16 compute; f32 doubles them.
_TM_TARGET_BF16 = {"v5e": 256, "v6e": 768, "v7x": 512, "unknown": 512}
_TF_TARGET = {"v5e": 1024, "v6e": 512, "v7x": 512, "unknown": 512}


def feed_forward(x, w1, b1, w2, b2, *, compute_dtype=None,
                 tm=None, tf=None, vmem_limit_bytes=None):
    """x: [N, d_model] -> [N, d_model]; fused linear -> relu -> linear."""
    N, d_model = x.shape
    d_ff = w1.shape[1]
    out_dtype = x.dtype

    # Optional bf16 compute path: bf16 MXU matmuls + half the weight DMA bytes,
    # accumulation stays f32 via preferred_element_type.
    if compute_dtype is not None:
        x = x.astype(compute_dtype)
        w1 = w1.astype(compute_dtype)
        w2 = w2.astype(compute_dtype)

    comp_itemsize = jnp.dtype(x.dtype).itemsize
    out_itemsize = jnp.dtype(out_dtype).itemsize
    b_itemsize = jnp.dtype(b1.dtype).itemsize

    gen = _detect_generation()

    # Generation-aware VMEM budget: ~102 MiB on v5e/v6e (128 MiB physical),
    # ~51 MiB on v7x (64 MiB physical) -- headroom left for compiler scratch.
    vmem_cap = _vmem_capacity_bytes(gen)
    if vmem_limit_bytes is None:
        vmem_limit_bytes = min(vmem_cap * 4 // 5, vmem_cap - (8 << 20))
    tile_budget = int(vmem_limit_bytes * 0.9)

    # Sublane packing alignment: 8 (f32) / 16 (bf16) / 32 (8-bit).
    sub = max(8, 32 // comp_itemsize)

    # Roofline-sized token tile.
    tm_target = tm if tm is not None else _TM_TARGET_BF16[gen] * comp_itemsize // 2
    tm_eff = min(tm_target, _round_up(N, sub))
    tm_eff = max(sub, (tm_eff // sub) * sub)

    # v7x has 2 TensorCores: make sure the 'parallel' token axis has >= 2 tiles.
    if gen == "v7x" and N > sub and _round_up(N, tm_eff) // tm_eff < 2:
        tm_eff = max(sub, _round_up((N + 1) // 2, sub))

    # d_ff slice: 256-aligned on v6e/v7x (256-wide MXU), 128 on v5e.
    tf_aligns = (128,) if gen == "v5e" else (256, 128)
    tf_target = tf if tf is not None else _TF_TARGET[gen]
    tf_eff = _pick_tile(d_ff, tf_target, tf_aligns)

    need_acc = out_dtype != jnp.float32

    def vmem_usage(tm_, tf_):
        x_b = 2 * tm_ * d_model * comp_itemsize           # double-buffered input
        o_b = 2 * tm_ * d_model * out_itemsize            # double-buffered output
        acc_b = tm_ * d_model * 4 if need_acc else 0      # f32 scratch (bf16 out only)
        w_b = 2 * 2 * d_model * tf_ * comp_itemsize       # w1 + w2, double-buffered
        bias_b = 2 * (tf_ + d_model) * b_itemsize
        return x_b + o_b + acc_b + w_b + bias_b

    # Fit the budget: shrink tf first (tm sets arithmetic intensity), then tm.
    while vmem_usage(tm_eff, tf_eff) > tile_budget and tf_eff > min(tf_aligns):
        smaller = _pick_tile(d_ff, tf_eff // 2, tf_aligns)
        if smaller >= tf_eff:
            break
        tf_eff = smaller
    while vmem_usage(tm_eff, tf_eff) > tile_budget and tm_eff > sub:
        tm_eff = max(sub, ((tm_eff // 2) // sub) * sub)

    n_pad = _round_up(N, tm_eff)
    if n_pad != N:
        x = jnp.pad(x, ((0, n_pad - N), (0, 0)))

    b1_2d = b1.reshape(1, d_ff)
    b2_2d = b2.reshape(1, d_model)

    grid = (n_pad // tm_eff, d_ff // tf_eff)
    n_tok_tiles = grid[0]

    # Advisory cost estimate with the *actual* HBM traffic: w1/w2 are
    # re-streamed once per token tile.
    flops = int(4 * n_pad * d_model * d_ff)
    bytes_accessed = int(
        n_tok_tiles * (2 * d_model * d_ff * comp_itemsize
                       + (d_ff + d_model) * b_itemsize)
        + n_pad * d_model * (comp_itemsize + out_itemsize))

    in_specs = [
        pl.BlockSpec((tm_eff, d_model), lambda i, k: (i, 0)),   # x (reused over k)
        pl.BlockSpec((d_model, tf_eff), lambda i, k: (0, k)),   # w1 slice
        pl.BlockSpec((1, tf_eff),       lambda i, k: (0, k)),   # b1 slice
        pl.BlockSpec((tf_eff, d_model), lambda i, k: (k, 0)),   # w2 slice
        pl.BlockSpec((1, d_model),      lambda i, k: (0, 0)),   # b2
    ]
    out_spec = pl.BlockSpec((tm_eff, d_model), lambda i, k: (i, 0))

    kernel = _ffn_kernel_acc if need_acc else _ffn_kernel_f32_out
    scratch = [pltpu.VMEM((tm_eff, d_model), jnp.float32)] if need_acc else []

    out = pl.pallas_call(
        kernel,
        out_shape=jax.ShapeDtypeStruct((n_pad, d_model), out_dtype),
        grid_spec=pltpu.PrefetchScalarGridSpec(
            num_scalar_prefetch=0,
            grid=grid,
            in_specs=in_specs,
            out_specs=out_spec,
            scratch_shapes=scratch,
        ),
        compiler_params=pltpu.CompilerParams(
            dimension_semantics=("parallel", "arbitrary"),
            vmem_limit_bytes=int(vmem_limit_bytes)),
        cost_estimate=pl.CostEstimate(flops=flops, transcendentals=0,
                                      bytes_accessed=bytes_accessed),
    )(x, w1, b1_2d, w2, b2_2d)

    return out[:N] if n_pad != N else out


def feed_forward_module(x_bsd, w1, b1, w2, b2, **kwargs):
    """x_bsd: [batch, seq, d_model] — matches the PyTorch module call."""
    B, S, D = x_bsd.shape
    y_flat = feed_forward(x_bsd.reshape(B * S, D), w1, b1, w2, b2, **kwargs)
    return y_flat.reshape(B, S, D)


if __name__ == "__main__":
    batch, seq, d_model, d_ff = 2, 8, 32, 64

    key = jax.random.PRNGKey(0)
    kx, kw1, kb1, kw2, kb2 = jax.random.split(key, 5)

    x = jax.random.normal(kx, (batch, seq, d_model), dtype=jnp.float32)
    # Deterministic "Kaiming-uniform-ish" init; shapes match nn.Linear
    # (pre-transposed: w1 [d_model, d_ff], w2 [d_ff, d_model]).
    w1 = jax.random.uniform(kw1, (d_model, d_ff), jnp.float32,
                            minval=-1.0, maxval=1.0) / jnp.sqrt(d_model)
    b1 = jax.random.uniform(kb1, (d_ff,), jnp.float32,
                            minval=-1.0, maxval=1.0) / jnp.sqrt(d_model)
    w2 = jax.random.uniform(kw2, (d_ff, d_model), jnp.float32,
                            minval=-1.0, maxval=1.0) / jnp.sqrt(d_ff)
    b2 = jax.random.uniform(kb2, (d_model,), jnp.float32,
                            minval=-1.0, maxval=1.0) / jnp.sqrt(d_ff)

    # Pure-JAX reference (same math as the PyTorch module).
    ref = jnp.maximum(x @ w1 + b1, 0.0) @ w2 + b2

    # 1) f32 path (output accumulated directly in the VMEM-resident out block).
    y = feed_forward_module(x, w1, b1, w2, b2)
    jax.block_until_ready(y)
    assert y.shape == (batch, seq, d_model)
    assert jnp.allclose(y, ref, atol=1e-5, rtol=1e-5)

    # 2) Non-tile-aligned token count exercises the padding path.
    x2 = jax.random.normal(kx, (5, 3, d_model), dtype=jnp.float32)
    y2 = feed_forward_module(x2, w1, b1, w2, b2)
    ref2 = jnp.maximum(x2 @ w1 + b1, 0.0) @ w2 + b2
    assert jnp.allclose(y2, ref2, atol=1e-5, rtol=1e-5)

    # 3) bf16 compute path (f32 in/out, bf16 MXU matmuls, f32 accumulation).
    y3 = feed_forward_module(x, w1, b1, w2, b2, compute_dtype=jnp.bfloat16)
    assert y3.dtype == jnp.float32
    assert jnp.allclose(y3, ref, atol=1e-1, rtol=1e-1)

    # 4) Fully-bf16 inputs (bf16 output -> f32-scratch kernel variant).
    yb = feed_forward_module(x.astype(jnp.bfloat16), w1.astype(jnp.bfloat16),
                             b1.astype(jnp.bfloat16), w2.astype(jnp.bfloat16),
                             b2.astype(jnp.bfloat16))
    assert yb.dtype == jnp.bfloat16
    assert jnp.allclose(yb.astype(jnp.float32), ref, atol=1.5e-1, rtol=1e-1)

    jax.block_until_ready((y, y2, y3, yb))
    print("KERNEL_OK")
</pallas_src>

<mosaic_0001>
module attributes {stable_mosaic.version = 11 : i64} {
  func.func @_ffn_kernel_f32_out(%arg0: i32, %arg1: i32, %arg2: memref<16x32xf32, #tpu.memory_space<vmem>>, %arg3: memref<32x64xf32, #tpu.memory_space<vmem>>, %arg4: memref<1x64xf32, #tpu.memory_space<vmem>>, %arg5: memref<64x32xf32, #tpu.memory_space<vmem>>, %arg6: memref<1x32xf32, #tpu.memory_space<vmem>>, %arg7: memref<16x32xf32, #tpu.memory_space<vmem>>) attributes {dimension_semantics = [#tpu.dimension_semantics<parallel>, #tpu.dimension_semantics<arbitrary>], iteration_bounds = array<i64: 1, 1>, scalar_prefetch = 0 : i64, scratch_operands = 0 : i64, tpu.core_type = #tpu.core_type<tc>, window_params = [{transform_indices = @transform_0, window_bounds = array<i64: 16, 32>}, {transform_indices = @transform_1, window_bounds = array<i64: 32, 64>}, {transform_indices = @transform_2, window_bounds = array<i64: 1, 64>}, {transform_indices = @transform_3, window_bounds = array<i64: 64, 32>}, {pipeline_mode = #tpu.pipeline_mode<synchronous>, transform_indices = @transform_4, window_bounds = array<i64: 1, 32>}, {transform_indices = @transform_5, window_bounds = array<i64: 16, 32>}]} {
    %c0 = arith.constant 0 : index
    %c0_0 = arith.constant 0 : index
    %0 = vector.load %arg2[%c0, %c0_0] : memref<16x32xf32, #tpu.memory_space<vmem>>, vector<16x32xf32>
    %c0_1 = arith.constant 0 : index
    %c0_2 = arith.constant 0 : index
    %1 = vector.load %arg3[%c0_1, %c0_2] : memref<32x64xf32, #tpu.memory_space<vmem>>, vector<32x64xf32>
    %cst = arith.constant dense<0.000000e+00> : vector<16x64xf32>
    %2 = tpu.matmul %0, %1, %cst {dimension_numbers = #tpu.dot_dimension_numbers<[1], [0], [0], [1], [0, 0, 1, 1], [], []>} : vector<16x32xf32>, vector<32x64xf32>, vector<16x64xf32> -> vector<16x64xf32>
    %c0_3 = arith.constant 0 : index
    %c0_4 = arith.constant 0 : index
    %3 = vector.load %arg4[%c0_3, %c0_4] : memref<1x64xf32, #tpu.memory_space<vmem>>, vector<1x64xf32>
    %4 = vector.broadcast %3 : vector<1x64xf32> to vector<16x64xf32>
    %5 = arith.addf %2, %4 : vector<16x64xf32>
    %cst_5 = arith.constant 0.000000e+00 : f32
    %6 = vector.broadcast %cst_5 : f32 to vector<16x64xf32>
    %7 = arith.maximumf %5, %6 : vector<16x64xf32>
    %c0_6 = arith.constant 0 : index
    %c0_7 = arith.constant 0 : index
    %8 = vector.load %arg5[%c0_6, %c0_7] : memref<64x32xf32, #tpu.memory_space<vmem>>, vector<64x32xf32>
    %cst_8 = arith.constant dense<0.000000e+00> : vector<16x32xf32>
    %9 = tpu.matmul %7, %8, %cst_8 {dimension_numbers = #tpu.dot_dimension_numbers<[1], [0], [0], [1], [0, 0, 1, 1], [], []>} : vector<16x64xf32>, vector<64x32xf32>, vector<16x32xf32> -> vector<16x32xf32>
    %c0_i32 = arith.constant 0 : i32
    %10 = arith.cmpi eq, %arg1, %c0_i32 : i32
    %11 = arith.extui %10 : i1 to i32
    %c0_i32_9 = arith.constant 0 : i32
    %12 = arith.cmpi ne, %11, %c0_i32_9 : i32
    scf.if %12 {
      %c0_12 = arith.constant 0 : index
      %c0_13 = arith.constant 0 : index
      %16 = vector.load %arg6[%c0_12, %c0_13] : memref<1x32xf32, #tpu.memory_space<vmem>>, vector<1x32xf32>
      %17 = vector.shape_cast %16 : vector<1x32xf32> to vector<1x32xf32>
      %18 = vector.broadcast %17 : vector<1x32xf32> to vector<16x32xf32>
      %19 = arith.addf %9, %18 : vector<16x32xf32>
      %c0_14 = arith.constant 0 : index
      %c0_15 = arith.constant 0 : index
      %20 = vector.load %arg7[%c0_14, %c0_15] : memref<16x32xf32, #tpu.memory_space<vmem>>, vector<16x32xf32>
      tpu.vector_store %arg7[%c0_14, %c0_15], %19 {strides = array<i32>} : memref<16x32xf32, #tpu.memory_space<vmem>>, vector<16x32xf32>,
    } else {
    }
    %c0_i32_10 = arith.constant 0 : i32
    %13 = arith.cmpi sgt, %arg1, %c0_i32_10 : i32
    %14 = arith.extui %13 : i1 to i32
    %c0_i32_11 = arith.constant 0 : i32
    %15 = arith.cmpi ne, %14, %c0_i32_11 : i32
    scf.if %15 {
      %c0_12 = arith.constant 0 : index
      %c0_13 = arith.constant 0 : index
      %16 = vector.load %arg7[%c0_12, %c0_13] : memref<16x32xf32, #tpu.memory_space<vmem>>, vector<16x32xf32>
      %17 = arith.addf %16, %9 : vector<16x32xf32>
      %c0_14 = arith.constant 0 : index
      %c0_15 = arith.constant 0 : index
      %18 = vector.load %arg7[%c0_14, %c0_15] : memref<16x32xf32, #tpu.memory_space<vmem>>, vector<16x32xf32>
      tpu.vector_store %arg7[%c0_14, %c0_15], %17 {strides = array<i32>} : memref<16x32xf32, #tpu.memory_space<vmem>>, vector<16x32xf32>,
    } else {
    }
    return
  }
  func.func @transform_0(%arg0: i32, %arg1: i32) -> (i32, i32) {
    %c0_i32 = arith.constant 0 : i32
    %c0_i32_0 = arith.constant 0 : i32
    return %arg0, %c0_i32 : i32, i32
  }
  func.func @transform_1(%arg0: i32, %arg1: i32) -> (i32, i32) {
    %c0_i32 = arith.constant 0 : i32
    %c0_i32_0 = arith.constant 0 : i32
    return %c0_i32, %arg1 : i32, i32
  }
  func.func @transform_2(%arg0: i32, %arg1: i32) -> (i32, i32) {
    %c0_i32 = arith.constant 0 : i32
    %c0_i32_0 = arith.constant 0 : i32
    return %c0_i32, %arg1 : i32, i32
  }
  func.func @transform_3(%arg0: i32, %arg1: i32) -> (i32, i32) {
    %c0_i32 = arith.constant 0 : i32
    %c0_i32_0 = arith.constant 0 : i32
    return %arg1, %c0_i32 : i32, i32
  }
  func.func @transform_4(%arg0: i32, %arg1: i32) -> (i32, i32) {
    %c0_i32 = arith.constant 0 : i32
    %c0_i32_0 = arith.constant 0 : i32
    %c0_i32_1 = arith.constant 0 : i32
    return %c0_i32, %c0_i32_0 : i32, i32
  }
  func.func @transform_5(%arg0: i32, %arg1: i32) -> (i32, i32) {
    %c0_i32 = arith.constant 0 : i32
    %c0_i32_0 = arith.constant 0 : i32
    return %arg0, %c0_i32 : i32, i32
  }
}

</mosaic_0001>

<llo_original>
// kernel: tpu_custom_call.1
$region0: #{tpu_custom_call.1}
  #allocation0 [shape = 'u32[]', space=smem, size = 0x4, offset = 0x4, fixed_abs, tag = 'smem constant byte address 0x4 - core index']
  #allocation1 [shape = 'u32[144,128]{1,0:T(1,128)}', space=vmem, size = 0x12000, scoped, tag = 'internal scratch']
  %s0 = inlined_call_operand.vmem [shape: f32[16,32], index: 0, kind: input, shape index: {}]
  %s1 = inlined_call_operand.vmem [shape: f32[32,64], index: 1, kind: input, shape index: {}]
  %s2 = inlined_call_operand.vmem [shape: f32[1,64], index: 2, kind: input, shape index: {}]
  %s3 = inlined_call_operand.vmem [shape: f32[64,32], index: 3, kind: input, shape index: {}]
  %s4 = inlined_call_operand.vmem [shape: f32[1,32], index: 4, kind: input, shape index: {}]
  %s5 = inlined_call_operand.hbm [shape: f32[16,32], index: 5, kind: output, shape index: {}]
  %s6 = sld [smem:[#allocation0]]
  $region38: #{tpu_custom_call.1} parent=0
    _
  %s8 = ssub.s32 1, %s6
  %s9 = scalar_select 0, %s8, %s6
  $region1: #{tpu_custom_call.1} parent=0
    #allocation2 [shape = 'u8[8192]{0}', space=vmem, size = 0x2000, scoped, tag = 'output window, operand 0, single buffered']
    #allocation3 [shape = 's32[1]{0}', space=sflag, size = 0x4, scoped, tag = 'scoped memory for tpu_custom_call.1']
    %10 = vsyncpa [#allocation3], 0
    // Predicated region
    $region2: #{tpu_custom_call.1} parent=1 // pred_check
      _
    $region3: #{tpu_custom_call.1} parent=1 // pred_check_branch
      %12 = sbr.rel (0) target = $region5
    $region4: #{tpu_custom_call.1} parent=1 // pred_region
      _
    $region5: #{tpu_custom_call.1} parent=1 // pred_fallthru
      _
    // Predicated region
    $region6: #{tpu_custom_call.1} parent=1 // pred_check
      _
    $region7: #{tpu_custom_call.1} parent=1 // pred_check_branch
      %14 = sbr.rel (0) target = $region9
    $region8: #{tpu_custom_call.1} parent=1 // pred_region
      _
    $region9: #{tpu_custom_call.1} parent=1 // pred_fallthru
      _
    // Predicated region
    $region10: #{tpu_custom_call.1} parent=1 // pred_check
      _
    $region11: #{tpu_custom_call.1} parent=1 // pred_check_branch
      %16 = sbr.rel (0) target = $region13
    $region12: #{tpu_custom_call.1} parent=1 // pred_region
      _
    $region13: #{tpu_custom_call.1} parent=1 // pred_fallthru
      _
    // Predicated region
    $region14: #{tpu_custom_call.1} parent=1 // pred_check
      _
    $region15: #{tpu_custom_call.1} parent=1 // pred_check_branch
      %18 = sbr.rel (0) target = $region17
    $region16: #{tpu_custom_call.1} parent=1 // pred_region
      _
    $region17: #{tpu_custom_call.1} parent=1 // pred_fallthru
      _
    // Predicated region
    $region18: #{tpu_custom_call.1} parent=1 // pred_check
      _
    $region19: #{tpu_custom_call.1} parent=1 // pred_check_branch
      %20 = sbr.rel (0) target = $region21
    $region20: #{tpu_custom_call.1} parent=1 // pred_region
      _
    $region21: #{tpu_custom_call.1} parent=1 // pred_fallthru
      _
    %v21 = vld [vmem:[%s0] sm:$0xff]
    %v22 = vld [vmem:[%s0 + $0x8] sm:$0xff]
    %v23 = vld [vmem:[%s1] sm:$0xff]
    %v24 = vld [vmem:[%s1 + $0x8] sm:$0xff]
    %v25 = vld [vmem:[%s1 + $0x10] sm:$0xff]
    %v26 = vld [vmem:[%s1 + $0x18] sm:$0xff]
    %v27 = vld [vmem:[%s2] sm:$0x1]
    %v29 = vlaneseq
    %v30 = vshrl.u32 %v29, 7
    %v31 = vsub.s32 0, %v30
    %v32 = vrot.slane %v27, %v31
    %vm34 = vcmask 261120
    %v36 = vsel %vm34, %v21, 0
    %v39 = vsel %vm34, %v22, 0
    %41 = vmatprep.subr.mxu0 0.0
    %42 = vmatpush1.msra.mxu0 0.0
    %43 = vmatprep.subr.mxu0 0.0
    %44 = vmatpush1.msra.mxu0 0.0
    %45 = vmatprep.subr.mxu0 0.0
    %46 = vmatpush1.msra.mxu0 0.0
    %47 = vmatprep.subr.mxu0 0.0
    %48 = vmatpush1.msra.mxu0 0.0
    %49 = vmatprep.subr.mxu0 0.0
    %50 = vmatpush1.msra.mxu0 0.0
    %51 = vmatprep.subr.mxu0 0.0
    %52 = vmatpush1.msra.mxu0 0.0
    %53 = vmatprep.subr.mxu0 0.0
    %54 = vmatpush1.msra.mxu0 0.0
    %55 = vmatprep.subr.mxu0 0.0
    %56 = vmatpush1.msra.mxu0 0.0
    %57 = vmatprep.subr.mxu0 0.0
    %58 = vmatpush1.msra.mxu0 0.0
    %59 = vmatprep.subr.mxu0 0.0
    %60 = vmatpush1.msra.mxu0 0.0
    %61 = vmatprep.subr.mxu0 0.0
    %62 = vmatpush1.msra.mxu0 0.0
    %63 = vmatprep.subr.mxu0 0.0
    %64 = vmatpush1.msra.mxu0 0.0
    %65 = vmatprep.subr.mxu0 0.0
    %66 = vmatpush1.msra.mxu0 %v26
    %67 = vmatprep.subr.mxu0 0.0
    %68 = vmatpush1.msra.mxu0 %v25
    %69 = vmatprep.subr.mxu0 0.0
    %70 = vmatpush1.msra.mxu0 %v24
    %71 = vmatprep.subr.mxu0 0.0
    %72 = vmatpush1.msra.mxu0 %v23
    %73 = vmatprep.subr.mxu0 0.0
    %74 = vmatpush2.msra.mxu0 0.0
    %75 = vmatprep.subr.mxu0 0.0
    %76 = vmatpush2.msra.mxu0 0.0
    %77 = vmatprep.subr.mxu0 0.0
    %78 = vmatpush2.msra.mxu0 0.0
    %79 = vmatprep.subr.mxu0 0.0
    %80 = vmatpush2.msra.mxu0 0.0
    %81 = vmatprep.subr.mxu0 0.0
    %82 = vmatpush2.msra.mxu0 0.0
    %83 = vmatprep.subr.mxu0 0.0
    %84 = vmatpush2.msra.mxu0 0.0
    %85 = vmatprep.subr.mxu0 0.0
    %86 = vmatpush2.msra.mxu0 0.0
    %87 = vmatprep.subr.mxu0 0.0
    %88 = vmatpush2.msra.mxu0 0.0
    %89 = vmatprep.subr.mxu0 0.0
    %90 = vmatpush2.msra.mxu0 0.0
    %91 = vmatprep.subr.mxu0 0.0
    %92 = vmatpush2.msra.mxu0 0.0
    %93 = vmatprep.subr.mxu0 0.0
    %94 = vmatpush2.msra.mxu0 0.0
    %95 = vmatprep.subr.mxu0 0.0
    %96 = vmatpush2.msra.mxu0 0.0
    %97 = vmatprep.subr.mxu0 0.0
    %98 = vmatpush2.msra.mxu0 0.0
    %99 = vmatprep.subr.mxu0 0.0
    %100 = vmatpush2.msra.mxu0 0.0
    %101 = vmatprep.subr.mxu0 0.0
    %102 = vmatpush2.msra.mxu0 0.0
    %103 = vmatprep.subr.mxu0 0.0
    %104 = vmatpush2.msra.mxu0 0.0
    %105 = vmatprep.mubr.f32.mxu0 0.0
    %106 = vmatmul.mubr.f32.gmra.mxu0 %v36
    %v107 = vpop.f32.mrf.mxu0
    %v108 = vadd.f32 %v32, %v107
    %v109 = vpop.f32.mrf.mxu0
    %110 = vmatprep.mubr.f32.mxu0 0.0
    %111 = vmatmul.mubr.f32.gmra.mxu0 %v39
    %v112 = vpop.f32.mrf.mxu0
    %v113 = vadd.f32 %v32, %v112
    %v114 = vpop.f32.mrf.mxu0
    %115 = vdwg.mxu0
    %v116 = vmax.f32 %v108, 0.0
    %v117 = vmax.f32 %v113, 0.0
    %v118 = vld [vmem:[%s3] sm:$0xff]
    %v119 = vld [vmem:[%s3 + $0x8] sm:$0xff]
    %v120 = vld [vmem:[%s3 + $0x10] sm:$0xff]
    %v121 = vld [vmem:[%s3 + $0x18] sm:$0xff]
    %v122 = vld [vmem:[%s3 + $0x20] sm:$0xff]
    %v123 = vld [vmem:[%s3 + $0x28] sm:$0xff]
    %v124 = vld [vmem:[%s3 + $0x30] sm:$0xff]
    %v125 = vld [vmem:[%s3 + $0x38] sm:$0xff]
    %vm126 = vcmask 523264
    %v128 = vsel %vm126, %v116, 0
    %v131 = vsel %vm126, %v117, 0
    %133 = vmatprep.subr.mxu0 0.0
    %134 = vmatpush1.msra.mxu0 0.0
    %135 = vmatprep.subr.mxu0 0.0
    %136 = vmatpush1.msra.mxu0 0.0
    %137 = vmatprep.subr.mxu0 0.0
    %138 = vmatpush1.msra.mxu0 0.0
    %139 = vmatprep.subr.mxu0 0.0
    %140 = vmatpush1.msra.mxu0 0.0
    %141 = vmatprep.subr.mxu0 0.0
    %142 = vmatpush1.msra.mxu0 0.0
    %143 = vmatprep.subr.mxu0 0.0
    %144 = vmatpush1.msra.mxu0 0.0
    %145 = vmatprep.subr.mxu0 0.0
    %146 = vmatpush1.msra.mxu0 0.0
    %147 = vmatprep.subr.mxu0 0.0
    %148 = vmatpush1.msra.mxu0 0.0
    %149 = vmatprep.subr.mxu0 0.0
    %150 = vmatpush1.msra.mxu0 %v125
    %151 = vmatprep.subr.mxu0 0.0
    %152 = vmatpush1.msra.mxu0 %v124
    %153 = vmatprep.subr.mxu0 0.0
    %154 = vmatpush1.msra.mxu0 %v123
    %155 = vmatprep.subr.mxu0 0.0
    %156 = vmatpush1.msra.mxu0 %v122
    %157 = vmatprep.subr.mxu0 0.0
    %158 = vmatpush1.msra.mxu0 %v121
    %159 = vmatprep.subr.mxu0 0.0
    %160 = vmatpush1.msra.mxu0 %v120
    %161 = vmatprep.subr.mxu0 0.0
    %162 = vmatpush1.msra.mxu0 %v119
    %163 = vmatprep.subr.mxu0 0.0
    %164 = vmatpush1.msra.mxu0 %v118
    %165 = vmatprep.subr.mxu0 0.0
    %166 = vmatpush2.msra.mxu0 0.0
    %167 = vmatprep.subr.mxu0 0.0
    %168 = vmatpush2.msra.mxu0 0.0
    %169 = vmatprep.subr.mxu0 0.0
    %170 = vmatpush2.msra.mxu0 0.0
    %171 = vmatprep.subr.mxu0 0.0
    %172 = vmatpush2.msra.mxu0 0.0
    %173 = vmatprep.subr.mxu0 0.0
    %174 = vmatpush2.msra.mxu0 0.0
    %175 = vmatprep.subr.mxu0 0.0
    %176 = vmatpush2.msra.mxu0 0.0
    %177 = vmatprep.subr.mxu0 0.0
    %178 = vmatpush2.msra.mxu0 0.0
    %179 = vmatprep.subr.mxu0 0.0
    %180 = vmatpush2.msra.mxu0 0.0
    %181 = vmatprep.subr.mxu0 0.0
    %182 = vmatpush2.msra.mxu0 0.0
    %183 = vmatprep.subr.mxu0 0.0
    %184 = vmatpush2.msra.mxu0 0.0
    %185 = vmatprep.subr.mxu0 0.0
    %186 = vmatpush2.msra.mxu0 0.0
    %187 = vmatprep.subr.mxu0 0.0
    %188 = vmatpush2.msra.mxu0 0.0
    %189 = vmatprep.subr.mxu0 0.0
    %190 = vmatpush2.msra.mxu0 0.0
    %191 = vmatprep.subr.mxu0 0.0
    %192 = vmatpush2.msra.mxu0 0.0
    %193 = vmatprep.subr.mxu0 0.0
    %194 = vmatpush2.msra.mxu0 0.0
    %195 = vmatprep.subr.mxu0 0.0
    %196 = vmatpush2.msra.mxu0 0.0
    %197 = vmatprep.mubr.f32.mxu0 0.0
    %198 = vmatmul.mubr.f32.gmra.mxu0 %v128
    %v199 = vpop.f32.mrf.mxu0
    %v200 = vadd.f32 0.0, %v199
    %v201 = vpop.f32.mrf.mxu0
    %202 = vmatprep.mubr.f32.mxu0 0.0
    %203 = vmatmul.mubr.f32.gmra.mxu0 %v131
    %v204 = vpop.f32.mrf.mxu0
    %v205 = vadd.f32 0.0, %v204
    %v206 = vpop.f32.mrf.mxu0
    %207 = vdwg.mxu0
    %p208 = scmp.eq.s32.totalorder 0, 0
    // Predicated region
    $region22: #{tpu_custom_call.1} parent=1 // pred_check
      %p209 = pneg %p208
    $region23: #{tpu_custom_call.1} parent=1 // pred_check_branch
      %211 = sbr.rel (%p209) target = $region25
    $region24: #{tpu_custom_call.1} parent=1 // pred_region
      %v212 = vld [vmem:[%s4] sm:$0x1]
      %v214 = vlaneseq
      %v215 = vshrl.u32 %v214, 7
      %v216 = vsub.s32 0, %v215
      %v217 = vrot.slane %v212, %v216
      %v219 = vadd.f32 %v200, %v217
      %v220 = vadd.f32 %v205, %v217
      %221 = vst.msk [vmem:[#allocation2] sm:$0xff] %vm34, %v219
      %222 = vst.msk [vmem:[#allocation2 + $0x8] sm:$0xff] %vm34, %v220
    $region25: #{tpu_custom_call.1} parent=1 // pred_fallthru
      _
    %p223 = scmp.gt.s32.totalorder 0, 0
    // Predicated region
    $region26: #{tpu_custom_call.1} parent=1 // pred_check
      %p224 = pneg %p223
    $region27: #{tpu_custom_call.1} parent=1 // pred_check_branch
      %226 = sbr.rel (%p224) target = $region29
    $region28: #{tpu_custom_call.1} parent=1 // pred_region
      %v227 = vld [vmem:[#allocation2] sm:$0xff]
      %v228 = vld [vmem:[#allocation2 + $0x8] sm:$0xff]
      %v229 = vadd.f32 %v227, %v200
      %v230 = vadd.f32 %v228, %v205
      %231 = vst.msk [vmem:[#allocation2] sm:$0xff] %vm34, %v229
      %232 = vst.msk [vmem:[#allocation2 + $0x8] sm:$0xff] %vm34, %v230
    $region29: #{tpu_custom_call.1} parent=1 // pred_fallthru
      _
    // Predicated region
    $region30: #{tpu_custom_call.1} parent=1 // pred_check
      _
    $region31: #{tpu_custom_call.1} parent=1 // pred_check_branch
      %234 = sbr.rel (0) target = $region33
    $region32: #{tpu_custom_call.1} parent=1 // pred_region
      %s236 = ssub.s32 256, 256
      %237 = vsyncadd [#allocation3], %s236
      %s238 = sshll.u32 [#allocation2], 4
      %s239 = int_to_ptr.vmem [resolvable:$true] %s238
      %244 = dma.vmem_to_hbm [thread:$0]  %s239, 256, %s5, [#allocation3], 128, 128, 8
    $region33: #{tpu_custom_call.1} parent=1 // pred_fallthru
      _
    // Predicated region
    $region34: #{tpu_custom_call.1} parent=1 // pred_check
      _
    $region35: #{tpu_custom_call.1} parent=1 // pred_check_branch
      %246 = sbr.rel (0) target = $region37
    $region36: #{tpu_custom_call.1} parent=1 // pred_region
      %247 = dma.done [#allocation3], 256
    $region37: #{tpu_custom_call.1} parent=1 // pred_fallthru
      _
    %248 = vsyncpa [#allocation3], 1

</llo_original>
